<compile_context>
chip_gen: v7x
topology: tpu7x:2x2x1
jax: 0.10.0
libtpu: 0.0.40
codegen_flags: <defaults>
</compile_context>

<pallas_src>
import functools

import jax
import jax.numpy as jnp
from jax.experimental import pallas as pl
from jax.experimental.pallas import tpu as pltpu


def _round_up(x, m):
    return (x + m - 1) // m * m


def _logreg_kernel(x_ref, w_ref, b_ref, o_ref, *, num_classes):
    # Linear layer on the MXU: [tm, D] @ [D, CPAD] -> [tm, CPAD] (f32 accumulate).
    # Padded weight columns are zero; their (zero) logits are sliced away below,
    # so they never touch the softmax max / denominator.
    logits = jnp.dot(x_ref[...], w_ref[...], preferred_element_type=jnp.float32)
    logits = logits[:, :num_classes] + b_ref[...]          # [tm, C]

    # Numerically-stable softmax over the real class axis only.
    m = jnp.max(logits, axis=-1, keepdims=True)
    e = jnp.exp(logits - m)
    denom = jnp.sum(e, axis=-1, keepdims=True)
    # Exact reciprocal: kernel is HBM-bound, EUP slot has slack -> zero cost,
    # and rows sum to 1 to within f32 rounding.
    o_ref[...] = (e / denom).astype(o_ref.dtype)


def prepare_params(w, b):
    """Build kernel-resident parameters ONCE (outside the per-call hot path).

    w: [D, C] f32, b: [C] f32 -> (w_padded [D, CPAD] f32, b_row [1, C] f32).
    The class axis of W is zero-padded to a multiple of 128 lanes so the MXU
    operand is lane-aligned in VMEM; the bias stays at its real width.
    """
    D, C = w.shape
    CPAD = _round_up(max(C, 128), 128)
    w_padded = jnp.zeros((D, CPAD), jnp.float32).at[:, :C].set(w.astype(jnp.float32))
    b_row = b.astype(jnp.float32).reshape(1, C)
    return w_padded, b_row


def logistic_regression_forward(x, w_padded, b_row, *, tm=None):
    """x: [B, D] f32, w_padded: [D, CPAD] f32, b_row: [1, C] f32 -> [B, C] softmax probs."""
    B, D = x.shape
    Dw, CPAD = w_padded.shape
    _, C = b_row.shape
    assert D == Dw

    # --- batch tile size -----------------------------------------------------
    # 512-1024 row tiles reach ~85% of the HBM roofline (vs ~63% at 256); at
    # D=32, C=4 a 1024-row tile is ~(1024*32 + 1024*4)*4 B ~= 144 KiB per buffer
    # (x2 double-buffered) + 16 KiB resident W  -> tiny on every generation.
    if tm is None:
        tm = 1024
    tm = max(8, min(_round_up(tm, 8), _round_up(B, 8)))

    # v7x has 2 TensorCores: make sure the "parallel" batch axis has >= 2 grid
    # steps when there is enough work to split (neutral on 1-TC v5e/v6e).
    if pl.cdiv(B, tm) < 2 and B > 8:
        tm = max(8, _round_up(pl.cdiv(B, 2), 8))

    # No wrapper-side padding of x: Pallas clips the overhanging last block
    # (out-of-bounds input rows are undefined, but they only feed output rows
    # that are masked out of the write-back).
    grid = (pl.cdiv(B, tm),)

    # VMEM note (v7x has 64 MiB physical / 32 MiB scoped default): the resident
    # W tile is D*CPAD*4 bytes (16 KiB at D=32).  If D ever grows past a few
    # MiB, raise pltpu.CompilerParams(vmem_limit_bytes=...) or tile D with an
    # f32 accumulator; nothing is needed at these sizes.
    kernel = functools.partial(_logreg_kernel, num_classes=C)

    out = pl.pallas_call(
        kernel,
        out_shape=jax.ShapeDtypeStruct((B, C), jnp.float32),
        grid=grid,
        in_specs=[
            pl.BlockSpec((tm, D), lambda i: (i, 0)),      # x: tiled over batch
            pl.BlockSpec((D, CPAD), lambda i: (0, 0)),    # W: resident in VMEM
            pl.BlockSpec((1, C), lambda i: (0, 0)),       # b: resident in VMEM
        ],
        # Narrow output block: last block dim == full array dim (C) -> legal,
        # and HBM writes only the real C columns.
        out_specs=pl.BlockSpec((tm, C), lambda i: (i, 0)),
        compiler_params=pltpu.CompilerParams(
            dimension_semantics=("parallel",),            # megacore sharding on v7x
        ),
    )(x.astype(jnp.float32), w_padded, b_row)

    return out


def reference_forward(x, w, b):
    logits = jnp.dot(x, w, precision=jax.lax.Precision.HIGHEST) + b[None, :]
    return jax.nn.softmax(logits, axis=1)


if __name__ == "__main__":
    key = jax.random.PRNGKey(0)
    k_x, k_w, k_b = jax.random.split(key, 3)

    # Small shapes implied by the module: batch=8, input_dim=32, output_dim=4
    B, D, C = 8, 32, 4

    x = jax.random.normal(k_x, (B, D), dtype=jnp.float32)

    # Deterministic nn.Linear-style init: U(-1/sqrt(D), 1/sqrt(D))
    bound = 1.0 / (D ** 0.5)
    w_t = jax.random.uniform(k_w, (C, D), minval=-bound, maxval=bound,
                             dtype=jnp.float32)   # PyTorch stores [out, in]
    w = w_t.T                                      # kernel layout: [D, C]
    b = jax.random.uniform(k_b, (C,), minval=-bound, maxval=bound,
                           dtype=jnp.float32)

    # Parameter layout is prepared once, outside the per-call path.
    w_padded, b_row = prepare_params(w, b)

    out = logistic_regression_forward(x, w_padded, b_row)
    out = jax.block_until_ready(out)

    ref = reference_forward(x, w, b)
    assert out.shape == (B, C)
    # Exact softmax denominator -> tight tolerances are back.
    assert jnp.allclose(out, ref, atol=1e-5, rtol=1e-4), "mismatch vs reference"
    # probabilities sum to 1 along the class axis
    assert jnp.allclose(jnp.sum(out, axis=1), jnp.ones((B,)), atol=1e-5)

    print("KERNEL_OK")
</pallas_src>

<mosaic_0001>
module attributes {stable_mosaic.version = 11 : i64} {
  func.func @_logreg_kernel(%arg0: i32, %arg1: memref<8x32xf32, #tpu.memory_space<vmem>>, %arg2: memref<32x128xf32, #tpu.memory_space<vmem>>, %arg3: memref<1x4xf32, #tpu.memory_space<vmem>>, %arg4: memref<8x4xf32, #tpu.memory_space<vmem>>) attributes {dimension_semantics = [#tpu.dimension_semantics<parallel>], iteration_bounds = array<i64: 1>, scalar_prefetch = 0 : i64, scratch_operands = 0 : i64, tpu.core_type = #tpu.core_type<tc>, window_params = [{transform_indices = @transform_0, window_bounds = array<i64: 8, 32>}, {pipeline_mode = #tpu.pipeline_mode<synchronous>, transform_indices = @transform_1, window_bounds = array<i64: 32, 128>}, {pipeline_mode = #tpu.pipeline_mode<synchronous>, transform_indices = @transform_2, window_bounds = array<i64: 1, 4>}, {transform_indices = @transform_3, window_bounds = array<i64: 8, 4>}]} {
    %c0 = arith.constant 0 : index
    %c0_0 = arith.constant 0 : index
    %0 = vector.load %arg1[%c0, %c0_0] : memref<8x32xf32, #tpu.memory_space<vmem>>, vector<8x32xf32>
    %c0_1 = arith.constant 0 : index
    %c0_2 = arith.constant 0 : index
    %1 = vector.load %arg2[%c0_1, %c0_2] : memref<32x128xf32, #tpu.memory_space<vmem>>, vector<32x128xf32>
    %cst = arith.constant dense<0.000000e+00> : vector<8x128xf32>
    %2 = tpu.matmul %0, %1, %cst {dimension_numbers = #tpu.dot_dimension_numbers<[1], [0], [0], [1], [0, 0, 1, 1], [], []>} : vector<8x32xf32>, vector<32x128xf32>, vector<8x128xf32> -> vector<8x128xf32>
    %3 = vector.extract_strided_slice %2 {offsets = [0, 0], sizes = [8, 4], strides = [1, 1]} : vector<8x128xf32> to vector<8x4xf32>
    %c0_3 = arith.constant 0 : index
    %c0_4 = arith.constant 0 : index
    %4 = vector.load %arg3[%c0_3, %c0_4] : memref<1x4xf32, #tpu.memory_space<vmem>>, vector<1x4xf32>
    %5 = vector.broadcast %4 : vector<1x4xf32> to vector<8x4xf32>
    %6 = arith.addf %3, %5 : vector<8x4xf32>
    %cst_5 = arith.constant dense<0xFF800000> : vector<8xf32>
    %7 = vector.multi_reduction <maximumf>, %6, %cst_5 [1] : vector<8x4xf32> to vector<8xf32>
    %8 = vector.shape_cast %7 : vector<8xf32> to vector<8x1xf32>
    %9 = vector.broadcast %8 : vector<8x1xf32> to vector<8x4xf32>
    %10 = arith.subf %6, %9 : vector<8x4xf32>
    %11 = math.exp %10 : vector<8x4xf32>
    %cst_6 = arith.constant dense<0.000000e+00> : vector<8xf32>
    %12 = vector.multi_reduction <add>, %11, %cst_6 [1] : vector<8x4xf32> to vector<8xf32>
    %13 = vector.shape_cast %12 : vector<8xf32> to vector<8x1xf32>
    %14 = vector.broadcast %13 : vector<8x1xf32> to vector<8x4xf32>
    %15 = arith.divf %11, %14 : vector<8x4xf32>
    %c0_7 = arith.constant 0 : index
    %c0_8 = arith.constant 0 : index
    %16 = vector.load %arg4[%c0_7, %c0_8] : memref<8x4xf32, #tpu.memory_space<vmem>>, vector<8x4xf32>
    tpu.vector_store %arg4[%c0_7, %c0_8], %15 {strides = array<i32>} : memref<8x4xf32, #tpu.memory_space<vmem>>, vector<8x4xf32>,
    return
  }
  func.func @transform_0(%arg0: i32) -> (i32, i32) {
    %c0_i32 = arith.constant 0 : i32
    %c0_i32_0 = arith.constant 0 : i32
    return %arg0, %c0_i32 : i32, i32
  }
  func.func @transform_1(%arg0: i32) -> (i32, i32) {
    %c0_i32 = arith.constant 0 : i32
    %c0_i32_0 = arith.constant 0 : i32
    %c0_i32_1 = arith.constant 0 : i32
    return %c0_i32, %c0_i32_0 : i32, i32
  }
  func.func @transform_2(%arg0: i32) -> (i32, i32) {
    %c0_i32 = arith.constant 0 : i32
    %c0_i32_0 = arith.constant 0 : i32
    %c0_i32_1 = arith.constant 0 : i32
    return %c0_i32, %c0_i32_0 : i32, i32
  }
  func.func @transform_3(%arg0: i32) -> (i32, i32) {
    %c0_i32 = arith.constant 0 : i32
    %c0_i32_0 = arith.constant 0 : i32
    return %arg0, %c0_i32 : i32, i32
  }
}

</mosaic_0001>

<llo_original>
// kernel: tpu_custom_call.1
$region0: #{tpu_custom_call.1}
  #allocation0 [shape = 'u32[]', space=smem, size = 0x4, offset = 0x4, fixed_abs, tag = 'smem constant byte address 0x4 - core index']
  #allocation1 [shape = 'u32[144,128]{1,0:T(1,128)}', space=vmem, size = 0x12000, scoped, tag = 'internal scratch']
  %s0 = inlined_call_operand.hbm [shape: f32[8,32], index: 0, kind: input, shape index: {}]
  %s1 = inlined_call_operand.hbm [shape: f32[32,128], index: 1, kind: input, shape index: {}]
  %s2 = inlined_call_operand.vmem [shape: f32[1,4], index: 2, kind: input, shape index: {}]
  %s3 = inlined_call_operand.vmem [shape: f32[8,4], index: 3, kind: output, shape index: {}]
  %s4 = sld [smem:[#allocation0]]
  $region30: #{tpu_custom_call.1} parent=0
    _
  %s6 = ssub.s32 1, %s4
  %s7 = scalar_select 0, %s6, %s4
  $region1: #{tpu_custom_call.1} parent=0
    #allocation2 [shape = 'u8[4096]{0}', space=vmem, size = 0x1000, scoped, tag = 'input window, operand 0, single buffered']
    #allocation3 [shape = 's32[1]{0}', space=sflag, size = 0x4, scoped, tag = 'scoped memory for tpu_custom_call.1']
    #allocation4 [shape = 'u8[16384]{0}', space=vmem, size = 0x4000, scoped, tag = 'input window, operand 1, single buffered']
    #allocation5 [shape = 's32[1]{0}', space=sflag, size = 0x4, scoped, tag = 'scoped memory for tpu_custom_call.1']
    %8 = vsyncpa [#allocation3], 0
    %9 = vsyncpa [#allocation5], 0
    // Predicated region
    $region2: #{tpu_custom_call.1} parent=1 // pred_check
      _
    $region3: #{tpu_custom_call.1} parent=1 // pred_check_branch
      %11 = sbr.rel (0) target = $region5
    $region4: #{tpu_custom_call.1} parent=1 // pred_region
      %s13 = ssub.s32 128, 128
      %14 = vsyncadd [#allocation3], %s13
      %s16 = sshll.u32 [#allocation2], 4
      %s17 = int_to_ptr.vmem [resolvable:$true] %s16
      %19 = dma.hbm_to_vmem [thread:$0]  %s0, 128, %s17, [#allocation3]
    $region5: #{tpu_custom_call.1} parent=1 // pred_fallthru
      _
    // Predicated region
    $region6: #{tpu_custom_call.1} parent=1 // pred_check
      _
    $region7: #{tpu_custom_call.1} parent=1 // pred_check_branch
      %21 = sbr.rel (0) target = $region9
    $region8: #{tpu_custom_call.1} parent=1 // pred_region
      %s23 = ssub.s32 512, 512
      %24 = vsyncadd [#allocation5], %s23
      %s25 = sshll.u32 [#allocation4], 4
      %s26 = int_to_ptr.vmem [resolvable:$true] %s25
      %31 = dma.hbm_to_vmem [thread:$0]  %s1, 512, %s26, [#allocation5], 128, 128, 8
    $region9: #{tpu_custom_call.1} parent=1 // pred_fallthru
      _
    // Predicated region
    $region10: #{tpu_custom_call.1} parent=1 // pred_check
      _
    $region11: #{tpu_custom_call.1} parent=1 // pred_check_branch
      %33 = sbr.rel (0) target = $region13
    $region12: #{tpu_custom_call.1} parent=1 // pred_region
      _
    $region13: #{tpu_custom_call.1} parent=1 // pred_fallthru
      _
    // Predicated region
    $region14: #{tpu_custom_call.1} parent=1 // pred_check
      _
    $region15: #{tpu_custom_call.1} parent=1 // pred_check_branch
      %35 = sbr.rel (0) target = $region17
    $region16: #{tpu_custom_call.1} parent=1 // pred_region
      %36 = dma.done [#allocation3], 128
    $region17: #{tpu_custom_call.1} parent=1 // pred_fallthru
      _
    // Predicated region
    $region18: #{tpu_custom_call.1} parent=1 // pred_check
      _
    $region19: #{tpu_custom_call.1} parent=1 // pred_check_branch
      %38 = sbr.rel (0) target = $region21
    $region20: #{tpu_custom_call.1} parent=1 // pred_region
      %39 = dma.done [#allocation5], 512
    $region21: #{tpu_custom_call.1} parent=1 // pred_fallthru
      _
    %v40 = vld [vmem:[#allocation2] sm:$0xff]
    %v41 = vld [vmem:[#allocation4] sm:$0xff]
    %v42 = vld [vmem:[#allocation4 + $0x8] sm:$0xff]
    %v43 = vld [vmem:[#allocation4 + $0x10] sm:$0xff]
    %v44 = vld [vmem:[#allocation4 + $0x18] sm:$0xff]
    %vm45 = vcmask 261120
    %v47 = vsel %vm45, %v40, 0
    %49 = vmatprep.subr.mxu0 0.0
    %50 = vmatpush1.msra.mxu0 %v41
    %51 = vmatprep.subr.mxu0 0.0
    %52 = vmatpush1.msra.mxu0 %v42
    %53 = vmatprep.subr.mxu0 0.0
    %54 = vmatpush1.msra.mxu0 %v43
    %55 = vmatprep.subr.mxu0 0.0
    %56 = vmatpush1.msra.mxu0 %v44
    %57 = vmatprep.subr.mxu0 0.0
    %58 = vmatpush1.msra.mxu0 0.0
    %59 = vmatprep.subr.mxu0 0.0
    %60 = vmatpush1.msra.mxu0 0.0
    %61 = vmatprep.subr.mxu0 0.0
    %62 = vmatpush1.msra.mxu0 0.0
    %63 = vmatprep.subr.mxu0 0.0
    %64 = vmatpush1.msra.mxu0 0.0
    %65 = vmatprep.subr.mxu0 0.0
    %66 = vmatpush1.msra.mxu0 0.0
    %67 = vmatprep.subr.mxu0 0.0
    %68 = vmatpush1.msra.mxu0 0.0
    %69 = vmatprep.subr.mxu0 0.0
    %70 = vmatpush1.msra.mxu0 0.0
    %71 = vmatprep.subr.mxu0 0.0
    %72 = vmatpush1.msra.mxu0 0.0
    %73 = vmatprep.subr.mxu0 0.0
    %74 = vmatpush1.msra.mxu0 0.0
    %75 = vmatprep.subr.mxu0 0.0
    %76 = vmatpush1.msra.mxu0 0.0
    %77 = vmatprep.subr.mxu0 0.0
    %78 = vmatpush1.msra.mxu0 0.0
    %79 = vmatprep.subr.mxu0 0.0
    %80 = vmatpush1.msra.mxu0 0.0
    %81 = vmatprep.subr.mxu0 0.0
    %82 = vmatpush1.msra.mxu0 0.0
    %83 = vmatprep.subr.mxu0 0.0
    %84 = vmatpush1.msra.mxu0 0.0
    %85 = vmatprep.subr.mxu0 0.0
    %86 = vmatpush1.msra.mxu0 0.0
    %87 = vmatprep.subr.mxu0 0.0
    %88 = vmatpush1.msra.mxu0 0.0
    %89 = vmatprep.subr.mxu0 0.0
    %90 = vmatpush1.msra.mxu0 0.0
    %91 = vmatprep.subr.mxu0 0.0
    %92 = vmatpush1.msra.mxu0 0.0
    %93 = vmatprep.subr.mxu0 0.0
    %94 = vmatpush1.msra.mxu0 0.0
    %95 = vmatprep.subr.mxu0 0.0
    %96 = vmatpush1.msra.mxu0 0.0
    %97 = vmatprep.subr.mxu0 0.0
    %98 = vmatpush1.msra.mxu0 0.0
    %99 = vmatprep.subr.mxu0 0.0
    %100 = vmatpush1.msra.mxu0 0.0
    %101 = vmatprep.subr.mxu0 0.0
    %102 = vmatpush1.msra.mxu0 0.0
    %103 = vmatprep.subr.mxu0 0.0
    %104 = vmatpush1.msra.mxu0 0.0
    %105 = vmatprep.subr.mxu0 0.0
    %106 = vmatpush1.msra.mxu0 0.0
    %107 = vmatprep.subr.mxu0 0.0
    %108 = vmatpush1.msra.mxu0 0.0
    %109 = vmatprep.subr.mxu0 0.0
    %110 = vmatpush1.msra.mxu0 0.0
    %111 = vmatprep.subr.mxu0 0.0
    %112 = vmatpush1.msra.mxu0 0.0
    %113 = vmatprep.mubr.f32.mxu0 0.0
    %114 = vmatmul.mubr.f32.gmra.mrb[0].mxu0 %v47
    %v115 = vpop.f32.mrb[0].mxu0
    %v116 = vadd.f32 0.0, %v115
    %v117 = vpop.f32.mrb[0].mxu0
    %118 = vdwg.mxu0
    %v119 = vld [vmem:[%s2] sm:$0x1]
    %v121 = vlaneseq
    %v122 = vshrl.u32 %v121, 7
    %v123 = vsub.s32 0, %v122
    %v124 = vrot.slane %v119, %v123
    %v126 = vadd.f32 %v116, %v124
    %vm127 = vcmask 31744
    %v128 = vsel %vm127, %v126, -inf
    %129 = vmax.xlane.f32.xlu0 %v128
    %v130 = vpop.xlane.xlu0 %129
    %v131 = vsub.f32 %v126, %v130
    %v132 = vmul.f32 %v131, 1.442695
    %v133 = vpow.pop %v132
    %v134 = vsel %vm127, %v133, 0.0
    %135 = vadd.xlane.f32.xlu0 %v134
    %v136 = vpop.xlane.xlu0 %135
    %v137 = vrcp.pop %v136
    %v138 = vmul.f32 %v133, %v137
    %139 = vst.msk [vmem:[%s3] sm:$0xff] %vm127, %v138
    // Predicated region
    $region22: #{tpu_custom_call.1} parent=1 // pred_check
      _
    $region23: #{tpu_custom_call.1} parent=1 // pred_check_branch
      %141 = sbr.rel (0) target = $region25
    $region24: #{tpu_custom_call.1} parent=1 // pred_region
      _
    $region25: #{tpu_custom_call.1} parent=1 // pred_fallthru
      _
    // Predicated region
    $region26: #{tpu_custom_call.1} parent=1 // pred_check
      _
    $region27: #{tpu_custom_call.1} parent=1 // pred_check_branch
      %143 = sbr.rel (0) target = $region29
    $region28: #{tpu_custom_call.1} parent=1 // pred_region
      _
    $region29: #{tpu_custom_call.1} parent=1 // pred_fallthru
      _
    %144 = vsyncpa [#allocation3], 1
    %145 = vsyncpa [#allocation5], 1

</llo_original>
